<compile_context>
chip_gen: v5e
topology: v5e:2x2
jax: 0.10.0
libtpu: 0.0.40
codegen_flags: <defaults>
</compile_context>

<pallas_src>
import jax
import jax.numpy as jnp
from jax.experimental import pallas as pl
from jax.experimental.pallas import tpu as pltpu


def _pow3_kernel(x_ref, o_ref):
    x = x_ref[...]
    o_ref[...] = x * x * x  # elementwise cube on the VPU


def _sublane_for(dtype) -> int:
    # Minimum sublane count per dtype packing: 8 for 32-bit, 16 for 16-bit,
    # 32 for 8-bit types.
    itemsize = jnp.dtype(dtype).itemsize
    return {4: 8, 2: 16, 1: 32}.get(itemsize, 8)


_LANE = 128
_SINGLE_SHOT_BYTES = 4 * 1024 * 1024   # per-operand threshold for the gridless path
_MAX_TILE_BYTES = 4 * 1024 * 1024      # per-tile cap for the tiled path (v7x-safe)


def pow3(a: jax.Array) -> jax.Array:
    """Elementwise a**3 via a Pallas TPU kernel. Works for any shape / dtype."""
    orig_shape = a.shape
    orig_dtype = a.dtype
    itemsize = jnp.dtype(orig_dtype).itemsize
    sublane = _sublane_for(orig_dtype)

    flat = a.reshape(-1)
    n = flat.shape[0]

    # Pad flat length up to a multiple of the minimum (sublane, 128) tile.
    min_tile = sublane * _LANE
    padded_n = ((n + min_tile - 1) // min_tile) * min_tile
    if padded_n != n:  # static check — no pad op emitted when already aligned
        flat = jnp.pad(flat, (0, padded_n - n))

    # Widest lane-dense layout: cols a multiple of 128, rows a multiple of
    # the sublane count. Wider lanes -> fewer, unmasked vst's per row.
    cols = _LANE
    for cand in (8192, 4096, 2048, 1024, 512, 256):
        if padded_n % cand == 0 and (padded_n // cand) % sublane == 0:
            cols = cand
            break
    rows = padded_n // cols
    x2d = flat.reshape(rows, cols)

    slab_bytes = padded_n * itemsize

    if slab_bytes <= _SINGLE_SHOT_BYTES:
        # Small input: one gridless call, whole slab resident in VMEM.
        out2d = pl.pallas_call(
            _pow3_kernel,
            out_shape=jax.ShapeDtypeStruct((rows, cols), orig_dtype),
            in_specs=[pl.BlockSpec(memory_space=pltpu.MemorySpace.VMEM)],
            out_specs=pl.BlockSpec(memory_space=pltpu.MemorySpace.VMEM),
        )(x2d)
    else:
        # Large input: 1-D grid over rows with big lane-dense tiles; cdiv grid
        # lets Pallas handle the ragged last block.
        rows_cap = max(
            sublane,
            (_MAX_TILE_BYTES // (cols * itemsize)) // sublane * sublane,
        )
        block_rows = min(rows, rows_cap)
        grid = (pl.cdiv(rows, block_rows),)
        out2d = pl.pallas_call(
            _pow3_kernel,
            out_shape=jax.ShapeDtypeStruct((rows, cols), orig_dtype),
            grid_spec=pltpu.PrefetchScalarGridSpec(
                num_scalar_prefetch=0,
                grid=grid,
                in_specs=[pl.BlockSpec((block_rows, cols), lambda i: (i, 0))],
                out_specs=pl.BlockSpec((block_rows, cols), lambda i: (i, 0)),
            ),
            compiler_params=pltpu.CompilerParams(
                dimension_semantics=("parallel",),
                # Headroom for double-buffered in+out tiles on all chips.
                vmem_limit_bytes=48 * 1024 * 1024,
            ),
        )(x2d)

    if padded_n != n:  # static check — slice only when padding was added
        return out2d.reshape(-1)[:n].reshape(orig_shape)
    return out2d.reshape(orig_shape)


if __name__ == "__main__":
    key = jax.random.PRNGKey(0)
    # Input shape consistent with an NCHW tensor: batch=2, channels=4, spatial=16.
    a = jax.random.normal(key, (2, 4, 16, 16), dtype=jnp.float32)

    out = pow3(a)
    out = jax.block_until_ready(out)

    expected = a * a * a
    assert out.shape == a.shape and out.dtype == a.dtype
    assert jnp.allclose(out, expected, atol=1e-6, rtol=1e-6)
    print("KERNEL_OK")
</pallas_src>

<mosaic_0001>
module attributes {stable_mosaic.version = 11 : i64} {
  func.func @_pow3_kernel(%arg0: memref<8x256xf32, #tpu.memory_space<vmem>>, %arg1: memref<8x256xf32, #tpu.memory_space<vmem>>) attributes {dimension_semantics = [], scalar_prefetch = 0 : i64, scratch_operands = 0 : i64, tpu.core_type = #tpu.core_type<tc>} {
    %c0 = arith.constant 0 : index
    %c0_0 = arith.constant 0 : index
    %0 = vector.load %arg0[%c0, %c0_0] : memref<8x256xf32, #tpu.memory_space<vmem>>, vector<8x256xf32>
    %1 = arith.mulf %0, %0 : vector<8x256xf32>
    %2 = arith.mulf %1, %0 : vector<8x256xf32>
    %c0_1 = arith.constant 0 : index
    %c0_2 = arith.constant 0 : index
    %3 = vector.load %arg1[%c0_1, %c0_2] : memref<8x256xf32, #tpu.memory_space<vmem>>, vector<8x256xf32>
    tpu.vector_store %arg1[%c0_1, %c0_2], %2 {strides = array<i32>} : memref<8x256xf32, #tpu.memory_space<vmem>>, vector<8x256xf32>,
    return
  }
}

</mosaic_0001>

<llo_original>
// kernel: tpu_custom_call.1
$region0: #{tpu_custom_call.1}
  #allocation0 [shape = 'u32[]', space=smem, size = 0x4, offset = 0x4, fixed_abs, tag = 'smem constant byte address 0x4 - core index']
  #allocation1 [shape = 'u32[72,128]{1,0:T(1,128)}', space=vmem, size = 0x9000, scoped, tag = 'internal scratch']
  %s0 = inlined_call_operand.hbm [shape: f32[8,256], index: 0, kind: input, shape index: {}]
  %s1 = inlined_call_operand.hbm [shape: f32[8,256], index: 1, kind: output, shape index: {}]
  %s2 = sld [smem:[#allocation0]]
  $region18: #{tpu_custom_call.1} parent=0
    _
  %s4 = ssub.s32 1, %s2
  %s5 = scalar_select 0, %s4, %s2
  $region1: #{tpu_custom_call.1} parent=0
    #allocation2 [shape = 'u8[8192]{0}', space=vmem, size = 0x2000, scoped, tag = 'input window, operand 0, single buffered']
    #allocation3 [shape = 's32[1]{0}', space=sflag, size = 0x4, scoped, tag = 'scoped memory for tpu_custom_call.1']
    #allocation4 [shape = 's32[1]{0}', space=sflag, size = 0x4, scoped, tag = 'scoped memory for tpu_custom_call.1']
    #allocation5 [shape = 'u8[8192]{0}', space=vmem, size = 0x2000, scoped, tag = 'output window, operand 0, single buffered']
    %6 = vsyncpa [#allocation3], 0
    %7 = vsyncpa [#allocation4], 0
    // Predicated region
    $region2: #{tpu_custom_call.1} parent=1 // pred_check
      _
    $region3: #{tpu_custom_call.1} parent=1 // pred_check_branch
      %9 = sbr.rel (0) target = $region5
    $region4: #{tpu_custom_call.1} parent=1 // pred_region
      %11 = vsyncadd [#allocation3], 0
      %s13 = sshll.u32 %s0, 4
      %s14 = int_to_ptr.hbm [resolvable:$true] %s13
      %s15 = sshll.u32 [#allocation2], 4
      %s16 = int_to_ptr.vmem [resolvable:$true] %s15
      %18 = dma.hbm_to_vmem [thread:$0]  %s14, 256, %s16, [#allocation3]
    $region5: #{tpu_custom_call.1} parent=1 // pred_fallthru
      _
    // Predicated region
    $region6: #{tpu_custom_call.1} parent=1 // pred_check
      _
    $region7: #{tpu_custom_call.1} parent=1 // pred_check_branch
      %20 = sbr.rel (0) target = $region9
    $region8: #{tpu_custom_call.1} parent=1 // pred_region
      %22 = dma.done [#allocation3], 256
    $region9: #{tpu_custom_call.1} parent=1 // pred_fallthru
      _
    %v23 = vld [vmem:[#allocation2] sm:$0xff]
    %v24 = vld [vmem:[#allocation2 + $0x8] sm:$0xff]
    %v25 = vmul.f32 %v23, %v23
    %v26 = vmul.f32 %v24, %v24
    %v27 = vmul.f32 %v25, %v23
    %v28 = vmul.f32 %v26, %v24
    %29 = vst [vmem:[#allocation5] sm:$0xff] %v27
    %30 = vst [vmem:[#allocation5 + $0x8] sm:$0xff] %v28
    // Predicated region
    $region10: #{tpu_custom_call.1} parent=1 // pred_check
      _
    $region11: #{tpu_custom_call.1} parent=1 // pred_check_branch
      %32 = sbr.rel (0) target = $region13
    $region12: #{tpu_custom_call.1} parent=1 // pred_region
      %34 = vsyncadd [#allocation4], 0
      %s36 = sshll.u32 [#allocation5], 4
      %s37 = int_to_ptr.vmem [resolvable:$true] %s36
      %s38 = sshll.u32 %s1, 4
      %s39 = int_to_ptr.hbm [resolvable:$true] %s38
      %41 = dma.vmem_to_hbm [thread:$0]  %s37, 256, %s39, [#allocation4]
    $region13: #{tpu_custom_call.1} parent=1 // pred_fallthru
      _
    // Predicated region
    $region14: #{tpu_custom_call.1} parent=1 // pred_check
      _
    $region15: #{tpu_custom_call.1} parent=1 // pred_check_branch
      %43 = sbr.rel (0) target = $region17
    $region16: #{tpu_custom_call.1} parent=1 // pred_region
      %45 = dma.done [#allocation4], 256
    $region17: #{tpu_custom_call.1} parent=1 // pred_fallthru
      _
    %46 = vsyncpa [#allocation3], 1
    %47 = vsyncpa [#allocation4], 1

</llo_original>
